<compile_context>
chip_gen: v5e
topology: v5e:2x2
jax: 0.10.0
libtpu: 0.0.40
codegen_flags: <defaults>
</compile_context>

<pallas_src>
import functools

import jax
import jax.numpy as jnp
from jax.experimental import pallas as pl
from jax.experimental.pallas import tpu as pltpu


def _poly(t, cp, ap, dp):
    # (cp + t) ** dp * ap, with the common integer dp=2 case kept as a plain multiply.
    u = cp + t
    if isinstance(dp, int) and dp == 2:
        return u * u * ap
    return (u ** dp) * ap


def _rpkn_kernel_bias(x_ref, w_ref, b_ref, o_ref, *, cp, ap, dp, tb):
    # x_ref: (TB, CKK, TL)  w_ref: (TO, CKK)  b_ref: (TO, 1)  o_ref: (TB, TO, TL)
    w = w_ref[...]
    b = b_ref[...]
    for i in range(tb):                                   # tb small & static -> unrolled
        t = jnp.dot(w, x_ref[i], preferred_element_type=jnp.float32)   # MXU, f32 acc
        t = t + b                                         # (TO, 1) broadcast over L
        o_ref[i] = _poly(t, cp, ap, dp).astype(o_ref.dtype)


def _rpkn_kernel_nobias(x_ref, w_ref, o_ref, *, cp, ap, dp, tb):
    w = w_ref[...]
    for i in range(tb):
        t = jnp.dot(w, x_ref[i], preferred_element_type=jnp.float32)
        o_ref[i] = _poly(t, cp, ap, dp).astype(o_ref.dtype)


def _round_up(x, m):
    return (x + m - 1) // m * m


def rpkn_forward(x_unf, w, b=None, *, ap=0.009, cp=0.47, dp=2,
                 tl_target=512, to_target=256, compute_dtype=None):
    """Pallas TPU implementation of RPKN.forward.

    x_unf: (B, C*k*k, L); w: (O, C, k, k) or (O, C*k*k); b: (O, 1)/(O,) or None.
    Returns (B, O, L) in x_unf.dtype.
    """
    B, CKK, L = x_unf.shape
    O = w.shape[0]
    w_flat = w.reshape(O, -1)                      # torch: w.view(O, -1)
    assert w_flat.shape[1] == CKK
    out_dtype = x_unf.dtype

    # Optional reduced-precision inputs for the mem-bound regime (f32 accumulate).
    if compute_dtype is not None:
        x_unf = x_unf.astype(compute_dtype)
        w_flat = w_flat.astype(compute_dtype)

    have_bias = b is not None
    if have_bias:
        b_arr = jnp.asarray(b).reshape(O, 1).astype(jnp.float32)

    # --- pad the contraction dim (sublane axis of x) to a multiple of 8 ---
    CKKp = _round_up(CKK, 8)
    if CKKp != CKK:
        x_unf = jnp.pad(x_unf, ((0, 0), (0, CKKp - CKK), (0, 0)))
        w_flat = jnp.pad(w_flat, ((0, 0), (0, CKKp - CKK)))

    # --- L (lane) tiling: 128-multiple tiles; full-dim block when L is small ---
    if L <= tl_target:
        TL, Lp = L, L                              # full-dim block (any L allowed)
    else:
        TL = tl_target                             # multiple of 128
        Lp = _round_up(L, TL)
        if Lp != L:
            x_unf = jnp.pad(x_unf, ((0, 0), (0, 0), (0, Lp - L)))

    # --- O tiling only when O is large ---
    if O <= to_target:
        TO, Op = O, O
    else:
        TO = to_target                             # multiple of 8 (MXU M)
        Op = _round_up(O, TO)
        if Op != O:
            w_flat = jnp.pad(w_flat, ((0, Op - O), (0, 0)))
            if have_bias:
                b_arr = jnp.pad(b_arr, ((0, Op - O), (0, 0)))

    # --- fuse small batches into one grid step (amortize ~0.35us/step overhead) ---
    x_item = jnp.dtype(x_unf.dtype).itemsize
    o_item = jnp.dtype(out_dtype).itemsize
    fused_blk_bytes = B * TL * (CKKp * x_item + TO * o_item)
    TB = B if (B <= 8 and 2 * fused_blk_bytes <= (4 << 20)) else 1

    n_b, n_l, n_o = B // TB, Lp // TL, Op // TO
    grid = (n_b, n_l, n_o)

    x_spec = pl.BlockSpec((TB, CKKp, TL), lambda bi, li, oi: (bi, 0, li))
    w_spec = pl.BlockSpec((TO, CKKp), lambda bi, li, oi: (oi, 0))
    o_spec = pl.BlockSpec((TB, TO, TL), lambda bi, li, oi: (bi, oi, li))

    if have_bias:
        b_spec = pl.BlockSpec((TO, 1), lambda bi, li, oi: (oi, 0))
        in_specs = [x_spec, w_spec, b_spec]
        kernel = functools.partial(_rpkn_kernel_bias, cp=cp, ap=ap, dp=dp, tb=TB)
        args = (x_unf, w_flat, b_arr)
    else:
        in_specs = [x_spec, w_spec]
        kernel = functools.partial(_rpkn_kernel_nobias, cp=cp, ap=ap, dp=dp, tb=TB)
        args = (x_unf, w_flat)

    out = pl.pallas_call(
        kernel,
        out_shape=jax.ShapeDtypeStruct((B, Op, Lp), out_dtype),
        grid_spec=pltpu.PrefetchScalarGridSpec(
            num_scalar_prefetch=0,
            grid=grid,
            in_specs=in_specs,
            out_specs=o_spec,
        ),
        compiler_params=pltpu.CompilerParams(
            # every grid point writes a distinct output block -> all parallel
            # (lets a 2-TC chip shard B x L-tiles x O-tiles across cores).
            dimension_semantics=("parallel", "parallel", "parallel"),
            vmem_limit_bytes=32 * 1024 * 1024,
        ),
    )(*args)

    if Op != O or Lp != L:
        out = out[:, :O, :L]
    return out


if __name__ == "__main__":
    key = jax.random.PRNGKey(0)
    k1, k2, k3 = jax.random.split(key, 3)

    # Small conv-unfold-consistent shapes:
    #   B=2 batches, C=4 in-channels, 3x3 kernel -> CKK=36, L=128 spatial, O=8.
    B, C, K, O, L = 2, 4, 3, 8, 128
    CKK = C * K * K
    ap, cp, dp = 0.009, 0.47, 2

    x_unf = jax.random.normal(k1, (B, CKK, L), dtype=jnp.float32)
    w = jax.random.normal(k2, (O, C, K, K), dtype=jnp.float32)
    b = jax.random.normal(k3, (O, 1), dtype=jnp.float32)

    out = jax.block_until_ready(rpkn_forward(x_unf, w, b, ap=ap, cp=cp, dp=dp))
    out_nb = jax.block_until_ready(rpkn_forward(x_unf, w, None, ap=ap, cp=cp, dp=dp))

    # Pure-JAX reference of the PyTorch semantics.
    w_flat = w.reshape(O, -1)
    t = jnp.einsum("bkl,ok->bol", x_unf, w_flat)
    ref = (cp + (t + b)) ** dp * ap
    ref_nb = (cp + t) ** dp * ap

    assert out.shape == (B, O, L)
    assert out_nb.shape == (B, O, L)
    assert jnp.allclose(out, ref, atol=1e-4, rtol=1e-3)
    assert jnp.allclose(out_nb, ref_nb, atol=1e-4, rtol=1e-3)

    print("KERNEL_OK")
</pallas_src>

<mosaic_0001>
module attributes {stable_mosaic.version = 11 : i64} {
  func.func @_rpkn_kernel_bias(%arg0: i32, %arg1: i32, %arg2: i32, %arg3: memref<2x40x128xf32, #tpu.memory_space<vmem>>, %arg4: memref<8x40xf32, #tpu.memory_space<vmem>>, %arg5: memref<8x1xf32, #tpu.memory_space<vmem>>, %arg6: memref<2x8x128xf32, #tpu.memory_space<vmem>>) attributes {dimension_semantics = [#tpu.dimension_semantics<parallel>, #tpu.dimension_semantics<parallel>, #tpu.dimension_semantics<parallel>], iteration_bounds = array<i64: 1, 1, 1>, scalar_prefetch = 0 : i64, scratch_operands = 0 : i64, tpu.core_type = #tpu.core_type<tc>, window_params = [{transform_indices = @transform_0, window_bounds = array<i64: 2, 40, 128>}, {transform_indices = @transform_1, window_bounds = array<i64: 8, 40>}, {transform_indices = @transform_2, window_bounds = array<i64: 8, 1>}, {transform_indices = @transform_3, window_bounds = array<i64: 2, 8, 128>}]} {
    %c0 = arith.constant 0 : index
    %c0_0 = arith.constant 0 : index
    %0 = vector.load %arg4[%c0, %c0_0] : memref<8x40xf32, #tpu.memory_space<vmem>>, vector<8x40xf32>
    %c0_1 = arith.constant 0 : index
    %c0_2 = arith.constant 0 : index
    %1 = vector.load %arg5[%c0_1, %c0_2] : memref<8x1xf32, #tpu.memory_space<vmem>>, vector<8x1xf32>
    %c0_3 = arith.constant 0 : index
    %c0_4 = arith.constant 0 : index
    %c0_5 = arith.constant 0 : index
    %2 = vector.load %arg3[%c0_3, %c0_4, %c0_5] : memref<2x40x128xf32, #tpu.memory_space<vmem>>, vector<1x40x128xf32>
    %3 = vector.shape_cast %2 : vector<1x40x128xf32> to vector<40x128xf32>
    %cst = arith.constant dense<0.000000e+00> : vector<8x128xf32>
    %4 = tpu.matmul %0, %3, %cst {dimension_numbers = #tpu.dot_dimension_numbers<[1], [0], [0], [1], [0, 0, 1, 1], [], []>} : vector<8x40xf32>, vector<40x128xf32>, vector<8x128xf32> -> vector<8x128xf32>
    %5 = vector.broadcast %1 : vector<8x1xf32> to vector<8x128xf32>
    %6 = arith.addf %4, %5 : vector<8x128xf32>
    %cst_6 = arith.constant 4.700000e-01 : f32
    %7 = vector.broadcast %cst_6 : f32 to vector<8x128xf32>
    %8 = arith.addf %7, %6 : vector<8x128xf32>
    %9 = arith.mulf %8, %8 : vector<8x128xf32>
    %cst_7 = arith.constant 0.00899999961 : f32
    %10 = vector.broadcast %cst_7 : f32 to vector<8x128xf32>
    %11 = arith.mulf %9, %10 : vector<8x128xf32>
    %c0_8 = arith.constant 0 : index
    %c0_9 = arith.constant 0 : index
    %c0_10 = arith.constant 0 : index
    %12 = vector.load %arg6[%c0_8, %c0_9, %c0_10] : memref<2x8x128xf32, #tpu.memory_space<vmem>>, vector<1x8x128xf32>
    %13 = vector.shape_cast %12 : vector<1x8x128xf32> to vector<8x128xf32>
    %14 = vector.shape_cast %11 : vector<8x128xf32> to vector<1x8x128xf32>
    tpu.vector_store %arg6[%c0_8, %c0_9, %c0_10], %14 {strides = array<i32>} : memref<2x8x128xf32, #tpu.memory_space<vmem>>, vector<1x8x128xf32>,
    %c1 = arith.constant 1 : index
    %c0_11 = arith.constant 0 : index
    %c0_12 = arith.constant 0 : index
    %15 = vector.load %arg3[%c1, %c0_11, %c0_12] : memref<2x40x128xf32, #tpu.memory_space<vmem>>, vector<1x40x128xf32>
    %16 = vector.shape_cast %15 : vector<1x40x128xf32> to vector<40x128xf32>
    %cst_13 = arith.constant dense<0.000000e+00> : vector<8x128xf32>
    %17 = tpu.matmul %0, %16, %cst_13 {dimension_numbers = #tpu.dot_dimension_numbers<[1], [0], [0], [1], [0, 0, 1, 1], [], []>} : vector<8x40xf32>, vector<40x128xf32>, vector<8x128xf32> -> vector<8x128xf32>
    %18 = vector.broadcast %1 : vector<8x1xf32> to vector<8x128xf32>
    %19 = arith.addf %17, %18 : vector<8x128xf32>
    %cst_14 = arith.constant 4.700000e-01 : f32
    %20 = vector.broadcast %cst_14 : f32 to vector<8x128xf32>
    %21 = arith.addf %20, %19 : vector<8x128xf32>
    %22 = arith.mulf %21, %21 : vector<8x128xf32>
    %cst_15 = arith.constant 0.00899999961 : f32
    %23 = vector.broadcast %cst_15 : f32 to vector<8x128xf32>
    %24 = arith.mulf %22, %23 : vector<8x128xf32>
    %c1_16 = arith.constant 1 : index
    %c0_17 = arith.constant 0 : index
    %c0_18 = arith.constant 0 : index
    %25 = vector.load %arg6[%c1_16, %c0_17, %c0_18] : memref<2x8x128xf32, #tpu.memory_space<vmem>>, vector<1x8x128xf32>
    %26 = vector.shape_cast %25 : vector<1x8x128xf32> to vector<8x128xf32>
    %27 = vector.shape_cast %24 : vector<8x128xf32> to vector<1x8x128xf32>
    tpu.vector_store %arg6[%c1_16, %c0_17, %c0_18], %27 {strides = array<i32>} : memref<2x8x128xf32, #tpu.memory_space<vmem>>, vector<1x8x128xf32>,
    return
  }
  func.func @transform_0(%arg0: i32, %arg1: i32, %arg2: i32) -> (i32, i32, i32) {
    %c0_i32 = arith.constant 0 : i32
    %c0_i32_0 = arith.constant 0 : i32
    return %arg0, %c0_i32, %arg1 : i32, i32, i32
  }
  func.func @transform_1(%arg0: i32, %arg1: i32, %arg2: i32) -> (i32, i32) {
    %c0_i32 = arith.constant 0 : i32
    %c0_i32_0 = arith.constant 0 : i32
    return %arg2, %c0_i32 : i32, i32
  }
  func.func @transform_2(%arg0: i32, %arg1: i32, %arg2: i32) -> (i32, i32) {
    %c0_i32 = arith.constant 0 : i32
    %c0_i32_0 = arith.constant 0 : i32
    return %arg2, %c0_i32 : i32, i32
  }
  func.func @transform_3(%arg0: i32, %arg1: i32, %arg2: i32) -> (i32, i32, i32) {
    %c0_i32 = arith.constant 0 : i32
    return %arg0, %arg2, %arg1 : i32, i32, i32
  }
}

</mosaic_0001>

<llo_original>
// kernel: tpu_custom_call.1
$region0: #{tpu_custom_call.1}
  #allocation0 [shape = 'u32[]', space=smem, size = 0x4, offset = 0x4, fixed_abs, tag = 'smem constant byte address 0x4 - core index']
  #allocation1 [shape = 'u32[72,128]{1,0:T(1,128)}', space=vmem, size = 0x9000, scoped, tag = 'internal scratch']
  %s0 = inlined_call_operand.hbm [shape: f32[2,40,128], index: 0, kind: input, shape index: {}]
  %s1 = inlined_call_operand.vmem [shape: f32[8,40], index: 1, kind: input, shape index: {}]
  %s2 = inlined_call_operand.vmem [shape: f32[8,1], index: 2, kind: input, shape index: {}]
  %s3 = inlined_call_operand.hbm [shape: f32[2,8,128], index: 3, kind: output, shape index: {}]
  %s4 = sld [smem:[#allocation0]]
  $region26: #{tpu_custom_call.1} parent=0
    _
  %s6 = ssub.s32 1, %s4
  %s7 = scalar_select 0, %s6, %s4
  $region1: #{tpu_custom_call.1} parent=0
    #allocation2 [shape = 'u8[40960]{0}', space=vmem, size = 0xa000, scoped, tag = 'input window, operand 0, single buffered']
    #allocation3 [shape = 's32[1]{0}', space=sflag, size = 0x4, scoped, tag = 'scoped memory for tpu_custom_call.1']
    #allocation4 [shape = 's32[1]{0}', space=sflag, size = 0x4, scoped, tag = 'scoped memory for tpu_custom_call.1']
    #allocation5 [shape = 'u8[8192]{0}', space=vmem, size = 0x2000, scoped, tag = 'output window, operand 0, single buffered']
    %8 = vsyncpa [#allocation3], 0
    %9 = vsyncpa [#allocation4], 0
    // Predicated region
    $region2: #{tpu_custom_call.1} parent=1 // pred_check
      _
    $region3: #{tpu_custom_call.1} parent=1 // pred_check_branch
      %11 = sbr.rel (0) target = $region5
    $region4: #{tpu_custom_call.1} parent=1 // pred_region
      %13 = vsyncadd [#allocation3], 0
      %s14 = sshll.u32 %s0, 4
      %s15 = int_to_ptr.hbm [resolvable:$true] %s14
      %s16 = sshll.u32 [#allocation2], 4
      %s17 = int_to_ptr.vmem [resolvable:$true] %s16
      %22 = dma.hbm_to_vmem [thread:$0]  %s15, 1280, %s17, [#allocation3], 128, 128, 8
    $region5: #{tpu_custom_call.1} parent=1 // pred_fallthru
      _
    // Predicated region
    $region6: #{tpu_custom_call.1} parent=1 // pred_check
      _
    $region7: #{tpu_custom_call.1} parent=1 // pred_check_branch
      %24 = sbr.rel (0) target = $region9
    $region8: #{tpu_custom_call.1} parent=1 // pred_region
      _
    $region9: #{tpu_custom_call.1} parent=1 // pred_fallthru
      _
    // Predicated region
    $region10: #{tpu_custom_call.1} parent=1 // pred_check
      _
    $region11: #{tpu_custom_call.1} parent=1 // pred_check_branch
      %26 = sbr.rel (0) target = $region13
    $region12: #{tpu_custom_call.1} parent=1 // pred_region
      _
    $region13: #{tpu_custom_call.1} parent=1 // pred_fallthru
      _
    // Predicated region
    $region14: #{tpu_custom_call.1} parent=1 // pred_check
      _
    $region15: #{tpu_custom_call.1} parent=1 // pred_check_branch
      %28 = sbr.rel (0) target = $region17
    $region16: #{tpu_custom_call.1} parent=1 // pred_region
      %30 = dma.done [#allocation3], 1280
    $region17: #{tpu_custom_call.1} parent=1 // pred_fallthru
      _
    %v31 = vld [vmem:[%s1] sm:$0xff]
    %v32 = vld [vmem:[%s2] sm:$0xff]
    %v33 = vld [vmem:[#allocation2] sm:$0xff]
    %v34 = vld [vmem:[#allocation2 + $0x8] sm:$0xff]
    %v35 = vld [vmem:[#allocation2 + $0x10] sm:$0xff]
    %v36 = vld [vmem:[#allocation2 + $0x18] sm:$0xff]
    %v37 = vld [vmem:[#allocation2 + $0x20] sm:$0xff]
    %39 = vset.pattern.permute.xlu0 0
    %40 = vperm.xlu0 %39, %v32
    %v41 = vpop.permute.xlu0 %40
    %vm43 = vcmask 326656
    %v45 = vsel %vm43, %v31, 0
    %47 = vmatpush.msra.mxu0 0.0
    %48 = vmatpush.msra.mxu0 0.0
    %49 = vmatpush.msra.mxu0 0.0
    %50 = vmatpush.msra.mxu0 0.0
    %51 = vmatpush.msra.mxu0 0.0
    %52 = vmatpush.msra.mxu0 0.0
    %53 = vmatpush.msra.mxu0 0.0
    %54 = vmatpush.msra.mxu0 0.0
    %55 = vmatpush.msra.mxu0 0.0
    %56 = vmatpush.msra.mxu0 0.0
    %57 = vmatpush.msra.mxu0 0.0
    %58 = vmatpush.msra.mxu0 %v37
    %59 = vmatpush.msra.mxu0 %v36
    %60 = vmatpush.msra.mxu0 %v35
    %61 = vmatpush.msra.mxu0 %v34
    %62 = vmatpush.msra.mxu0 %v33
    %63 = vmatmul.f32.gmra.mxu0 %v45
    %v64 = vpop.f32.mrf.mxu0
    %v65 = vadd.f32 %v41, %v64
    %66 = vdwg.mxu0
    %v67 = vadd.f32 %v65, 0.47
    %v68 = vmul.f32 %v67, %v67
    %v69 = vmul.f32 %v68, 0.009
    %70 = vst [vmem:[#allocation5] sm:$0xff] %v69
    %s71 = scalar_lea.vmem [#allocation2], 40
    %v72 = vld [vmem:[%s71] sm:$0xff]
    %v73 = vld [vmem:[%s71 + $0x8] sm:$0xff]
    %v74 = vld [vmem:[%s71 + $0x10] sm:$0xff]
    %v75 = vld [vmem:[%s71 + $0x18] sm:$0xff]
    %v76 = vld [vmem:[%s71 + $0x20] sm:$0xff]
    %77 = vmatpush.msra.mxu0 0.0
    %78 = vmatpush.msra.mxu0 0.0
    %79 = vmatpush.msra.mxu0 0.0
    %80 = vmatpush.msra.mxu0 0.0
    %81 = vmatpush.msra.mxu0 0.0
    %82 = vmatpush.msra.mxu0 0.0
    %83 = vmatpush.msra.mxu0 0.0
    %84 = vmatpush.msra.mxu0 0.0
    %85 = vmatpush.msra.mxu0 0.0
    %86 = vmatpush.msra.mxu0 0.0
    %87 = vmatpush.msra.mxu0 0.0
    %88 = vmatpush.msra.mxu0 %v76
    %89 = vmatpush.msra.mxu0 %v75
    %90 = vmatpush.msra.mxu0 %v74
    %91 = vmatpush.msra.mxu0 %v73
    %92 = vmatpush.msra.mxu0 %v72
    %93 = vmatmul.f32.gmra.mxu0 %v45
    %v94 = vpop.f32.mrf.mxu0
    %v95 = vadd.f32 %v41, %v94
    %96 = vdwg.mxu0
    %v97 = vadd.f32 %v95, 0.47
    %v98 = vmul.f32 %v97, %v97
    %v99 = vmul.f32 %v98, 0.009
    %s100 = scalar_lea.vmem [#allocation5], 8
    %101 = vst [vmem:[%s100] sm:$0xff] %v99
    // Predicated region
    $region18: #{tpu_custom_call.1} parent=1 // pred_check
      _
    $region19: #{tpu_custom_call.1} parent=1 // pred_check_branch
      %103 = sbr.rel (0) target = $region21
    $region20: #{tpu_custom_call.1} parent=1 // pred_region
      %105 = vsyncadd [#allocation4], 0
      %s106 = sshll.u32 [#allocation5], 4
      %s107 = int_to_ptr.vmem [resolvable:$true] %s106
      %s108 = sshll.u32 %s3, 4
      %s109 = int_to_ptr.hbm [resolvable:$true] %s108
      %114 = dma.vmem_to_hbm [thread:$0]  %s107, 256, %s109, [#allocation4], 128, 128, 8
    $region21: #{tpu_custom_call.1} parent=1 // pred_fallthru
      _
    // Predicated region
    $region22: #{tpu_custom_call.1} parent=1 // pred_check
      _
    $region23: #{tpu_custom_call.1} parent=1 // pred_check_branch
      %116 = sbr.rel (0) target = $region25
    $region24: #{tpu_custom_call.1} parent=1 // pred_region
      %118 = dma.done [#allocation4], 256
    $region25: #{tpu_custom_call.1} parent=1 // pred_fallthru
      _
    %119 = vsyncpa [#allocation3], 1
    %120 = vsyncpa [#allocation4], 1

</llo_original>
